<compile_context>
chip_gen: v5e
topology: v5e:2x2
jax: 0.10.0
libtpu: 0.0.40
codegen_flags: <defaults>
</compile_context>

<pallas_src>
import jax
import jax.numpy as jnp
from jax.experimental import pallas as pl
from jax.experimental.pallas import tpu as pltpu


def _cdiv(a, b):
    return (a + b - 1) // b


def _vmem_capacity_bytes():
    try:
        cap = int(getattr(pltpu.get_tpu_info(), "vmem_capacity_bytes", 0))
        if cap > 0:
            return cap
    except Exception:
        pass
    return 128 << 20          # v5e / v6e default


def _perm_equiv_kernel(x_ref, gw_ref, gb_ref, lw_ref, o_ref):
    tb, n, d_in = x_ref.shape
    tn = gw_ref.shape[1]

    x = x_ref[...]                                            # (TB, N, D_in)

    # Per-batch max over the set axis -- one XLU cross-sublane reduce.
    xm = jnp.max(x, axis=1)                                   # (TB, D_in)

    # Lambda: (TB, D_in) @ (D_in, TN), no bias, f32 accumulation.
    xm_l = jnp.dot(xm, lw_ref[...],
                   preferred_element_type=jnp.float32)        # (TB, TN)

    # Gamma: one big matmul over all TB*N rows of this batch tile.
    xg = jnp.dot(x.reshape(tb * n, d_in), gw_ref[...],
                 preferred_element_type=jnp.float32)          # (TB*N, TN)
    xg = xg.reshape(tb, n, tn) + gb_ref[...].astype(jnp.float32)[None, :, :]

    # Epilogue stays in f32; single cast at the store.
    o_ref[...] = (xg - xm_l[:, None, :]).astype(o_ref.dtype)


def _plan_tiles(B, N, D_in, D_out, in_itemsize, out_itemsize):
    """Pick (tb, tn, grid_b, grid_j, single_buffer_weights, vmem_limit)."""
    cap = _vmem_capacity_bytes()
    # ~48 MiB usable budget on 64 MiB parts (v7x), ~96 MiB on 128 MiB parts.
    budget = max(min(cap - (16 << 20), int(cap * 0.75)), 16 << 20)
    # 64 MiB VMEM => v7x-class chip (2 TensorCores): want >=4 grid steps so
    # each core gets >=2 pipelined steps.  1-TC parts only need 2 for overlap.
    min_steps = 4 if cap <= (64 << 20) else 2

    # --- D_out tiling (only kicks in for large feature dims) ---------------
    w_full = (2 * D_in * D_out + D_out) * in_itemsize         # gw + lw + gb, once
    weight_budget = max(budget // 3, 8 << 20)
    if w_full <= weight_budget or D_out <= 256:
        tn, grid_j = D_out, 1
    else:
        per_col2 = 2 * (2 * D_in + 1) * in_itemsize           # dbl-buffered / out col
        tn = (weight_budget // per_col2) // 128 * 128
        tn = int(max(128, min(tn, D_out)))
        grid_j = _cdiv(D_out, tn)
        if grid_j == 1:
            tn = D_out
    single_buffer_weights = grid_j == 1
    w_vmem = (w_full if single_buffer_weights
              else 2 * (2 * D_in * tn + tn) * in_itemsize)

    # --- batch tile ---------------------------------------------------------
    avail = max(budget - w_vmem, 1 << 20)
    per_b = 2 * N * (D_in * in_itemsize + tn * out_itemsize)  # dbl-buffered x + out
    tb = int(max(1, min(avail // per_b, B)))
    if grid_j < min_steps and B > 1:
        need_b = _cdiv(min_steps, grid_j)
        tb = min(tb, max(1, _cdiv(B, need_b)))
    grid_b = _cdiv(B, tb)

    need = w_vmem + tb * per_b
    vmem_limit = int(min(max(need + (8 << 20), 32 << 20), cap))
    return tb, tn, grid_b, grid_j, single_buffer_weights, vmem_limit


def _pallas_forward(x, gw, gb, lw, out_dtype, tb, tn, grid_b, grid_j,
                    single_buffer_weights, vmem_limit):
    B, N, D_in = x.shape
    D_out = gw.shape[1]

    wkw = dict(pipeline_mode=pl.Buffered(1)) if single_buffer_weights else {}
    in_specs = [
        pl.BlockSpec((tb, N, D_in), lambda b, j: (b, 0, 0)),
        pl.BlockSpec((D_in, tn), lambda b, j: (0, j), **wkw),   # Gamma W
        pl.BlockSpec((1, tn), lambda b, j: (0, j), **wkw),      # Gamma bias
        pl.BlockSpec((D_in, tn), lambda b, j: (0, j), **wkw),   # Lambda W
    ]
    out_specs = pl.BlockSpec((tb, N, tn), lambda b, j: (b, 0, j))

    flops = 2 * B * N * D_in * D_out + 2 * B * D_in * D_out
    bytes_accessed = (
        x.size * jnp.dtype(x.dtype).itemsize
        + B * N * D_out * jnp.dtype(out_dtype).itemsize
        + (gw.size + lw.size) * jnp.dtype(gw.dtype).itemsize
        + gb.size * jnp.dtype(gb.dtype).itemsize)

    return pl.pallas_call(
        _perm_equiv_kernel,
        out_shape=jax.ShapeDtypeStruct((B, N, D_out), out_dtype),
        grid_spec=pltpu.PrefetchScalarGridSpec(
            num_scalar_prefetch=0,
            grid=(grid_b, grid_j),
            in_specs=in_specs,
            out_specs=out_specs,
        ),
        compiler_params=pltpu.CompilerParams(
            dimension_semantics=("parallel", "arbitrary"),
            vmem_limit_bytes=vmem_limit),
        cost_estimate=pl.CostEstimate(flops=flops, transcendentals=0,
                                      bytes_accessed=int(bytes_accessed)),
    )(x, gw, gb, lw)


def permutation_equivariant(x, gamma_w, gamma_b, lambda_w, *, storage_dtype=None):
    """Deep Sets permutation-equivariant layer.

    x        : (B, N, D_in)
    gamma_w  : (D_in, D_out)   Gamma weight (already transposed to in x out)
    gamma_b  : (1, D_out)      Gamma bias
    lambda_w : (D_in, D_out)   Lambda weight (no bias)
    storage_dtype : optional narrower dtype (e.g. jnp.bfloat16) for the
        HBM-resident x / weight operands (halves read traffic on v6e/v7x);
        accumulation + epilogue stay f32 and the output keeps x.dtype.
        Default None = exact f32 spec.
    returns  : (B, N, D_out)
    """
    B, N, D_in = x.shape
    D_out = gamma_w.shape[1]
    out_dtype = x.dtype

    if storage_dtype is not None and jnp.dtype(storage_dtype) != x.dtype:
        x_s = x.astype(storage_dtype)
        gw_s = gamma_w.astype(storage_dtype)
        lw_s = lambda_w.astype(storage_dtype)
    else:
        x_s, gw_s, lw_s = x, gamma_w, lambda_w
    gb_s = gamma_b                      # bias stays f32; added in the f32 epilogue

    in_itemsize = jnp.dtype(x_s.dtype).itemsize
    out_itemsize = jnp.dtype(out_dtype).itemsize

    tb, tn, grid_b, grid_j, single_w, vmem_limit = _plan_tiles(
        B, N, D_in, D_out, in_itemsize, out_itemsize)

    try:
        return _pallas_forward(x_s, gw_s, gb_s, lw_s, out_dtype, tb, tn,
                               grid_b, grid_j, single_w, vmem_limit)
    except Exception:
        if not single_w:
            raise
        # Fallback: default double-buffered weight blocks if this JAX build
        # rejects pipeline_mode=pl.Buffered(1) on the constant operands.
        return _pallas_forward(x_s, gw_s, gb_s, lw_s, out_dtype, tb, tn,
                               grid_b, grid_j, False, vmem_limit)


def permutation_equivariant_ref(x, gamma_w, gamma_b, lambda_w):
    xm = jnp.max(x, axis=1, keepdims=True)           # (B, 1, D_in)
    xm = xm @ lambda_w                               # (B, 1, D_out)
    xg = x @ gamma_w + gamma_b[None, :, :]           # (B, N, D_out)
    return xg - xm


if __name__ == "__main__":
    B, N, D_in, D_out = 8, 8, 32, 32

    key = jax.random.PRNGKey(0)
    k_x, k_gw, k_gb, k_lw = jax.random.split(key, 4)

    x = jax.random.normal(k_x, (B, N, D_in), dtype=jnp.float32)
    # PyTorch Linear parameter shapes: weight (out, in), bias (out,)
    gamma_w = jax.random.normal(k_gw, (D_out, D_in), dtype=jnp.float32) * 0.1
    gamma_b = jax.random.normal(k_gb, (D_out,), dtype=jnp.float32) * 0.1
    lambda_w = jax.random.normal(k_lw, (D_out, D_in), dtype=jnp.float32) * 0.1

    # Transpose to (D_in, D_out) for x @ W layout; bias as (1, D_out).
    gw_t = gamma_w.T
    lw_t = lambda_w.T
    gb_2d = gamma_b.reshape(1, D_out)

    out = permutation_equivariant(x, gw_t, gb_2d, lw_t)
    out = jax.block_until_ready(out)

    ref = permutation_equivariant_ref(x, gw_t, gb_2d, lw_t)
    assert out.shape == (B, N, D_out)
    assert jnp.allclose(out, ref, atol=1e-5, rtol=1e-5), \
        float(jnp.max(jnp.abs(out - ref)))

    print("KERNEL_OK")
</pallas_src>

<mosaic_0001>
module attributes {stable_mosaic.version = 11 : i64} {
  func.func @_perm_equiv_kernel(%arg0: i32, %arg1: i32, %arg2: memref<4x8x32xf32, #tpu.memory_space<vmem>>, %arg3: memref<32x32xf32, #tpu.memory_space<vmem>>, %arg4: memref<1x32xf32, #tpu.memory_space<vmem>>, %arg5: memref<32x32xf32, #tpu.memory_space<vmem>>, %arg6: memref<4x8x32xf32, #tpu.memory_space<vmem>>) attributes {dimension_semantics = [#tpu.dimension_semantics<parallel>, #tpu.dimension_semantics<arbitrary>], iteration_bounds = array<i64: 2, 1>, scalar_prefetch = 0 : i64, scratch_operands = 0 : i64, tpu.core_type = #tpu.core_type<tc>, window_params = [{transform_indices = @transform_0, window_bounds = array<i64: 4, 8, 32>}, {pipeline_mode = #tpu.pipeline_mode<synchronous>, transform_indices = @transform_1, window_bounds = array<i64: 32, 32>}, {pipeline_mode = #tpu.pipeline_mode<synchronous>, transform_indices = @transform_2, window_bounds = array<i64: 1, 32>}, {pipeline_mode = #tpu.pipeline_mode<synchronous>, transform_indices = @transform_3, window_bounds = array<i64: 32, 32>}, {transform_indices = @transform_4, window_bounds = array<i64: 4, 8, 32>}]} {
    %c0 = arith.constant 0 : index
    %c0_0 = arith.constant 0 : index
    %c0_1 = arith.constant 0 : index
    %0 = vector.load %arg2[%c0, %c0_0, %c0_1] : memref<4x8x32xf32, #tpu.memory_space<vmem>>, vector<4x8x32xf32>
    %cst = arith.constant dense<0xFF800000> : vector<4x32xf32>
    %1 = vector.multi_reduction <maximumf>, %0, %cst [1] : vector<4x8x32xf32> to vector<4x32xf32>
    %c0_2 = arith.constant 0 : index
    %c0_3 = arith.constant 0 : index
    %2 = vector.load %arg5[%c0_2, %c0_3] : memref<32x32xf32, #tpu.memory_space<vmem>>, vector<32x32xf32>
    %cst_4 = arith.constant dense<0.000000e+00> : vector<4x32xf32>
    %3 = tpu.matmul %1, %2, %cst_4 {dimension_numbers = #tpu.dot_dimension_numbers<[1], [0], [0], [1], [0, 0, 1, 1], [], []>} : vector<4x32xf32>, vector<32x32xf32>, vector<4x32xf32> -> vector<4x32xf32>
    %4 = vector.shape_cast %0 : vector<4x8x32xf32> to vector<32x32xf32>
    %c0_5 = arith.constant 0 : index
    %c0_6 = arith.constant 0 : index
    %5 = vector.load %arg3[%c0_5, %c0_6] : memref<32x32xf32, #tpu.memory_space<vmem>>, vector<32x32xf32>
    %cst_7 = arith.constant dense<0.000000e+00> : vector<32x32xf32>
    %6 = tpu.matmul %4, %5, %cst_7 {dimension_numbers = #tpu.dot_dimension_numbers<[1], [0], [0], [1], [0, 0, 1, 1], [], []>} : vector<32x32xf32>, vector<32x32xf32>, vector<32x32xf32> -> vector<32x32xf32>
    %7 = vector.shape_cast %6 : vector<32x32xf32> to vector<4x8x32xf32>
    %c0_8 = arith.constant 0 : index
    %c0_9 = arith.constant 0 : index
    %8 = vector.load %arg4[%c0_8, %c0_9] : memref<1x32xf32, #tpu.memory_space<vmem>>, vector<1x32xf32>
    %9 = vector.shape_cast %8 : vector<1x32xf32> to vector<1x1x32xf32>
    %10 = vector.broadcast %9 : vector<1x1x32xf32> to vector<4x8x32xf32>
    %11 = arith.addf %7, %10 : vector<4x8x32xf32>
    %12 = vector.shape_cast %3 : vector<4x32xf32> to vector<4x1x32xf32>
    %13 = vector.broadcast %12 : vector<4x1x32xf32> to vector<4x8x32xf32>
    %14 = arith.subf %11, %13 : vector<4x8x32xf32>
    %c0_10 = arith.constant 0 : index
    %c0_11 = arith.constant 0 : index
    %c0_12 = arith.constant 0 : index
    %15 = vector.load %arg6[%c0_10, %c0_11, %c0_12] : memref<4x8x32xf32, #tpu.memory_space<vmem>>, vector<4x8x32xf32>
    tpu.vector_store %arg6[%c0_10, %c0_11, %c0_12], %14 {strides = array<i32>} : memref<4x8x32xf32, #tpu.memory_space<vmem>>, vector<4x8x32xf32>,
    return
  }
  func.func @transform_0(%arg0: i32, %arg1: i32) -> (i32, i32, i32) {
    %c0_i32 = arith.constant 0 : i32
    %c0_i32_0 = arith.constant 0 : i32
    %c0_i32_1 = arith.constant 0 : i32
    return %arg0, %c0_i32, %c0_i32_0 : i32, i32, i32
  }
  func.func @transform_1(%arg0: i32, %arg1: i32) -> (i32, i32) {
    %c0_i32 = arith.constant 0 : i32
    %c0_i32_0 = arith.constant 0 : i32
    return %c0_i32, %arg1 : i32, i32
  }
  func.func @transform_2(%arg0: i32, %arg1: i32) -> (i32, i32) {
    %c0_i32 = arith.constant 0 : i32
    %c0_i32_0 = arith.constant 0 : i32
    return %c0_i32, %arg1 : i32, i32
  }
  func.func @transform_3(%arg0: i32, %arg1: i32) -> (i32, i32) {
    %c0_i32 = arith.constant 0 : i32
    %c0_i32_0 = arith.constant 0 : i32
    return %c0_i32, %arg1 : i32, i32
  }
  func.func @transform_4(%arg0: i32, %arg1: i32) -> (i32, i32, i32) {
    %c0_i32 = arith.constant 0 : i32
    %c0_i32_0 = arith.constant 0 : i32
    return %arg0, %c0_i32, %arg1 : i32, i32, i32
  }
}

module attributes {stable_mosaic.version = 11 : i64} {
  func.func @_perm_equiv_kernel(%arg0: i32, %arg1: i32, %arg2: memref<4x8x32xf32, #tpu.memory_space<vmem>>, %arg3: memref<32x32xf32, #tpu.memory_space<vmem>>, %arg4: memref<1x32xf32, #tpu.memory_space<vmem>>, %arg5: memref<32x32xf32, #tpu.memory_space<vmem>>, %arg6: memref<4x8x32xf32, #tpu.memory_space<vmem>>) attributes {dimension_semantics = [#tpu.dimension_semantics<parallel>, #tpu.dimension_semantics<arbitrary>], iteration_bounds = array<i64: 2, 1>, scalar_prefetch = 0 : i64, scratch_operands = 0 : i64, tpu.core_type = #tpu.core_type<tc>, window_params = [{transform_indices = @transform_0, window_bounds = array<i64: 4, 8, 32>}, {transform_indices = @transform_1, window_bounds = array<i64: 32, 32>}, {transform_indices = @transform_2, window_bounds = array<i64: 1, 32>}, {transform_indices = @transform_3, window_bounds = array<i64: 32, 32>}, {transform_indices = @transform_4, window_bounds = array<i64: 4, 8, 32>}]} {
    %c0 = arith.constant 0 : index
    %c0_0 = arith.constant 0 : index
    %c0_1 = arith.constant 0 : index
    %0 = vector.load %arg2[%c0, %c0_0, %c0_1] : memref<4x8x32xf32, #tpu.memory_space<vmem>>, vector<4x8x32xf32>
    %cst = arith.constant dense<0xFF800000> : vector<4x32xf32>
    %1 = vector.multi_reduction <maximumf>, %0, %cst [1] : vector<4x8x32xf32> to vector<4x32xf32>
    %c0_2 = arith.constant 0 : index
    %c0_3 = arith.constant 0 : index
    %2 = vector.load %arg5[%c0_2, %c0_3] : memref<32x32xf32, #tpu.memory_space<vmem>>, vector<32x32xf32>
    %cst_4 = arith.constant dense<0.000000e+00> : vector<4x32xf32>
    %3 = tpu.matmul %1, %2, %cst_4 {dimension_numbers = #tpu.dot_dimension_numbers<[1], [0], [0], [1], [0, 0, 1, 1], [], []>} : vector<4x32xf32>, vector<32x32xf32>, vector<4x32xf32> -> vector<4x32xf32>
    %4 = vector.shape_cast %0 : vector<4x8x32xf32> to vector<32x32xf32>
    %c0_5 = arith.constant 0 : index
    %c0_6 = arith.constant 0 : index
    %5 = vector.load %arg3[%c0_5, %c0_6] : memref<32x32xf32, #tpu.memory_space<vmem>>, vector<32x32xf32>
    %cst_7 = arith.constant dense<0.000000e+00> : vector<32x32xf32>
    %6 = tpu.matmul %4, %5, %cst_7 {dimension_numbers = #tpu.dot_dimension_numbers<[1], [0], [0], [1], [0, 0, 1, 1], [], []>} : vector<32x32xf32>, vector<32x32xf32>, vector<32x32xf32> -> vector<32x32xf32>
    %7 = vector.shape_cast %6 : vector<32x32xf32> to vector<4x8x32xf32>
    %c0_8 = arith.constant 0 : index
    %c0_9 = arith.constant 0 : index
    %8 = vector.load %arg4[%c0_8, %c0_9] : memref<1x32xf32, #tpu.memory_space<vmem>>, vector<1x32xf32>
    %9 = vector.shape_cast %8 : vector<1x32xf32> to vector<1x1x32xf32>
    %10 = vector.broadcast %9 : vector<1x1x32xf32> to vector<4x8x32xf32>
    %11 = arith.addf %7, %10 : vector<4x8x32xf32>
    %12 = vector.shape_cast %3 : vector<4x32xf32> to vector<4x1x32xf32>
    %13 = vector.broadcast %12 : vector<4x1x32xf32> to vector<4x8x32xf32>
    %14 = arith.subf %11, %13 : vector<4x8x32xf32>
    %c0_10 = arith.constant 0 : index
    %c0_11 = arith.constant 0 : index
    %c0_12 = arith.constant 0 : index
    %15 = vector.load %arg6[%c0_10, %c0_11, %c0_12] : memref<4x8x32xf32, #tpu.memory_space<vmem>>, vector<4x8x32xf32>
    tpu.vector_store %arg6[%c0_10, %c0_11, %c0_12], %14 {strides = array<i32>} : memref<4x8x32xf32, #tpu.memory_space<vmem>>, vector<4x8x32xf32>,
    return
  }
  func.func @transform_0(%arg0: i32, %arg1: i32) -> (i32, i32, i32) {
    %c0_i32 = arith.constant 0 : i32
    %c0_i32_0 = arith.constant 0 : i32
    %c0_i32_1 = arith.constant 0 : i32
    return %arg0, %c0_i32, %c0_i32_0 : i32, i32, i32
  }
  func.func @transform_1(%arg0: i32, %arg1: i32) -> (i32, i32) {
    %c0_i32 = arith.constant 0 : i32
    %c0_i32_0 = arith.constant 0 : i32
    return %c0_i32, %arg1 : i32, i32
  }
  func.func @transform_2(%arg0: i32, %arg1: i32) -> (i32, i32) {
    %c0_i32 = arith.constant 0 : i32
    %c0_i32_0 = arith.constant 0 : i32
    return %c0_i32, %arg1 : i32, i32
  }
  func.func @transform_3(%arg0: i32, %arg1: i32) -> (i32, i32) {
    %c0_i32 = arith.constant 0 : i32
    %c0_i32_0 = arith.constant 0 : i32
    return %c0_i32, %arg1 : i32, i32
  }
  func.func @transform_4(%arg0: i32, %arg1: i32) -> (i32, i32, i32) {
    %c0_i32 = arith.constant 0 : i32
    %c0_i32_0 = arith.constant 0 : i32
    return %arg0, %c0_i32, %arg1 : i32, i32, i32
  }
}

</mosaic_0001>

<llo_original>
// kernel: tpu_custom_call.1
$region0: #{tpu_custom_call.1}
  #allocation0 [shape = 'u32[]', space=smem, size = 0x4, offset = 0x4, fixed_abs, tag = 'smem constant byte address 0x4 - core index']
  #allocation1 [shape = 'u32[72,128]{1,0:T(1,128)}', space=vmem, size = 0x9000, scoped, tag = 'internal scratch']
  %s0 = inlined_call_operand.hbm [shape: f32[8,8,32], index: 0, kind: input, shape index: {}]
  %s1 = inlined_call_operand.hbm [shape: f32[32,32], index: 1, kind: input, shape index: {}]
  %s2 = inlined_call_operand.vmem [shape: f32[1,32], index: 2, kind: input, shape index: {}]
  %s3 = inlined_call_operand.hbm [shape: f32[32,32], index: 3, kind: input, shape index: {}]
  %s4 = inlined_call_operand.hbm [shape: f32[8,8,32], index: 4, kind: output, shape index: {}]
  %s5 = sld [smem:[#allocation0]]
  $region61: #{tpu_custom_call.1} parent=0
    _
  %s7 = ssub.s32 1, %s5
  %s8 = scalar_select 0, %s7, %s5
  $region1: #{tpu_custom_call.1} parent=0
    #allocation2 [shape = 'u8[32768]{0}', space=vmem, size = 0x8000, scoped, tag = 'input window, operand 0']
    #allocation3 [shape = 's32[2]{0}', space=sflag, size = 0x8, scoped, tag = 'scoped memory for tpu_custom_call.1']
    #allocation4 [shape = 's32[2]{0}', space=sflag, size = 0x8, scoped, tag = 'scoped memory for tpu_custom_call.1']
    #allocation5 [shape = 'u8[16384]{0}', space=vmem, size = 0x4000, scoped, tag = 'input window, operand 1, single buffered']
    #allocation6 [shape = 's32[1]{0}', space=sflag, size = 0x4, scoped, tag = 'scoped memory for tpu_custom_call.1']
    #allocation7 [shape = 'u8[16384]{0}', space=vmem, size = 0x4000, scoped, tag = 'input window, operand 3, single buffered']
    #allocation8 [shape = 'u8[32768]{0}', space=vmem, size = 0x8000, scoped, tag = 'output window, operand 0']
    %9 = vsyncpa [#allocation3], 0
    %s10 = scalar_lea.sflag [#allocation3], 1
    %11 = vsyncpa %s10, 0
    %12 = vsyncpa [#allocation6], 0
    %13 = vsyncpa [#allocation4], 0
    %s14 = scalar_lea.sflag [#allocation4], 1
    %15 = vsyncpa %s14, 0
    loop: start=0, step=1, limit=4
    $region2: #{tpu_custom_call.1} parent=1 // loop_pre_header
      _
    $region3: #{tpu_custom_call.1} parent=1 // loop_header
      %s17 = sphi 0, %s21
      %p18 = scmp.ge.s32.totalorder %s17, 4
      %s24 = sphi 0, %s36
      %s25 = sphi 0, %s32
      %s26 = sphi 0, %s24
      %s27 = sphi 0, %s25
      %s28 = sphi 0, %s26
      %s29 = sphi 0, %s27
      %s39 = sphi 0, %s41
      %s42 = sphi 0, %s39
      %s43 = sphi 0, %s42
      %s59 = sphi 0, %s43
      %s65 = sphi 0, %s67
      %s68 = sphi 0, %s65
      %s69 = sphi 0, %s68
      %s85 = sphi 0, %s69
      %s91 = sphi 0, %s93
      %s94 = sphi 0, %s91
      %s95 = sphi 0, %s94
      %s111 = sphi 0, %s95
      %s117 = sphi 0, %s119
      %s120 = sphi 0, %s117
      %s121 = sphi 0, %s120
      %s137 = sphi 0, %s121
      %s145 = sphi 0, %s147
      %s148 = sphi 0, %s145
      %s149 = sphi 0, %s148
      %s165 = sphi 0, %s149
    $region4: #{tpu_custom_call.1} parent=1 // loop_header_branch
      %20 = sbr.rel (%p18) target = $region8
    $region5: #{tpu_custom_call.1} parent=1 // loop_body
      %s22 = ssub.s32 %s17, 1
      %s23 = ssub.s32 %s17, 2
      %s30 = sadd.s32 1, %s25
      %p31 = scmp.ge.s32.totalorder %s30, 1
      %s32 = scalar_select %p31, 0, %s30
      %s33 = sadd.s32 1, %s24
      %s34 = scalar_select %p31, %s33, %s24
      %p35 = scmp.ge.s32.totalorder %s34, 2
      %s36 = scalar_select %p35, 0, %s34
      %s37 = ssub.s32 %s24, %s36
      %p38 = scmp.eq.s32.totalorder %s37, 0
      %s40 = sadd.s32 %s39, 1
      %s41 = scalar_select %p38, %s39, %s40
      %p44 = pneg %p38
      %p45 = scmp.eq.s32.totalorder %s17, 1
      %p46 = por %p44, %p45
      %p47 = scmp.ne.s32.totalorder %s39, %s42
      %p48 = scmp.eq.s32.totalorder %s17, 0
      %p49 = por %p47, %p48
      %p50 = scmp.ne.s32.totalorder %s39, %s42
      %p51 = scmp.eq.s32.totalorder %s22, 1
      %p52 = por %p50, %p51
      %p53 = scmp.ne.s32.totalorder %s42, %s43
      %p54 = scmp.eq.s32.totalorder %s22, 0
      %p55 = por %p53, %p54
      %p56 = scmp.ne.s32.totalorder %s42, %s43
      %p57 = scmp.eq.s32.totalorder %s23, 1
      %p58 = por %p56, %p57
      %p60 = scmp.ne.s32.totalorder %s43, %s59
      %p61 = scmp.eq.s32.totalorder %s23, 0
      %p62 = por %p60, %p61
      %s63 = ssub.s32 %s25, %s32
      %p64 = scmp.eq.s32.totalorder %s63, 0
      %s66 = sadd.s32 %s65, 1
      %s67 = scalar_select %p64, %s65, %s66
      %p70 = pneg %p64
      %p71 = scmp.eq.s32.totalorder %s17, 1
      %p72 = por %p70, %p71
      %p73 = scmp.ne.s32.totalorder %s65, %s68
      %p74 = scmp.eq.s32.totalorder %s17, 0
      %p75 = por %p73, %p74
      %p76 = scmp.ne.s32.totalorder %s65, %s68
      %p77 = scmp.eq.s32.totalorder %s22, 1
      %p78 = por %p76, %p77
      %p79 = scmp.ne.s32.totalorder %s68, %s69
      %p80 = scmp.eq.s32.totalorder %s22, 0
      %p81 = por %p79, %p80
      %p82 = scmp.ne.s32.totalorder %s68, %s69
      %p83 = scmp.eq.s32.totalorder %s23, 1
      %p84 = por %p82, %p83
      %p86 = scmp.ne.s32.totalorder %s69, %s85
      %p87 = scmp.eq.s32.totalorder %s23, 0
      %p88 = por %p86, %p87
      %s89 = ssub.s32 %s25, %s32
      %p90 = scmp.eq.s32.totalorder %s89, 0
      %s92 = sadd.s32 %s91, 1
      %s93 = scalar_select %p90, %s91, %s92
      %p96 = pneg %p90
      %p97 = scmp.eq.s32.totalorder %s17, 1
      %p98 = por %p96, %p97
      %p99 = scmp.ne.s32.totalorder %s91, %s94
      %p100 = scmp.eq.s32.totalorder %s17, 0
      %p101 = por %p99, %p100
      %p102 = scmp.ne.s32.totalorder %s91, %s94
      %p103 = scmp.eq.s32.totalorder %s22, 1
      %p104 = por %p102, %p103
      %p105 = scmp.ne.s32.totalorder %s94, %s95
      %p106 = scmp.eq.s32.totalorder %s22, 0
      %p107 = por %p105, %p106
      %p108 = scmp.ne.s32.totalorder %s94, %s95
      %p109 = scmp.eq.s32.totalorder %s23, 1
      %p110 = por %p108, %p109
      %p112 = scmp.ne.s32.totalorder %s95, %s111
      %p113 = scmp.eq.s32.totalorder %s23, 0
      %p114 = por %p112, %p113
      %s115 = ssub.s32 %s25, %s32
      %p116 = scmp.eq.s32.totalorder %s115, 0
      %s118 = sadd.s32 %s117, 1
      %s119 = scalar_select %p116, %s117, %s118
      %p122 = pneg %p116
      %p123 = scmp.eq.s32.totalorder %s17, 1
      %p124 = por %p122, %p123
      %p125 = scmp.ne.s32.totalorder %s117, %s120
      %p126 = scmp.eq.s32.totalorder %s17, 0
      %p127 = por %p125, %p126
      %p128 = scmp.ne.s32.totalorder %s117, %s120
      %p129 = scmp.eq.s32.totalorder %s22, 1
      %p130 = por %p128, %p129
      %p131 = scmp.ne.s32.totalorder %s120, %s121
      %p132 = scmp.eq.s32.totalorder %s22, 0
      %p133 = por %p131, %p132
      %p134 = scmp.ne.s32.totalorder %s120, %s121
      %p135 = scmp.eq.s32.totalorder %s23, 1
      %p136 = por %p134, %p135
      %p138 = scmp.ne.s32.totalorder %s121, %s137
      %p139 = scmp.eq.s32.totalorder %s23, 0
      %p140 = por %p138, %p139
      %s141 = ssub.s32 %s24, %s36
      %s142 = ssub.s32 %s25, %s32
      %s143 = sor.u32 %s141, %s142
      %p144 = scmp.eq.s32.totalorder %s143, 0
      %s146 = sadd.s32 %s145, 1
      %s147 = scalar_select %p144, %s145, %s146
      %p150 = pneg %p144
      %p151 = scmp.eq.s32.totalorder %s17, 1
      %p152 = por %p150, %p151
      %p153 = scmp.ne.s32.totalorder %s145, %s148
      %p154 = scmp.eq.s32.totalorder %s17, 0
      %p155 = por %p153, %p154
      %p156 = scmp.ne.s32.totalorder %s145, %s148
      %p157 = scmp.eq.s32.totalorder %s22, 1
      %p158 = por %p156, %p157
      %p159 = scmp.ne.s32.totalorder %s148, %s149
      %p160 = scmp.eq.s32.totalorder %s22, 0
      %p161 = por %p159, %p160
      %p162 = scmp.ne.s32.totalorder %s148, %s149
      %p163 = scmp.eq.s32.totalorder %s23, 1
      %p164 = por %p162, %p163
      %p166 = scmp.ne.s32.totalorder %s149, %s165
      %p167 = scmp.eq.s32.totalorder %s23, 0
      %p168 = por %p166, %p167
      %p169 = scmp.le.s32.totalorder 1, %s17
      %p170 = scmp.lt.s32.totalorder %s17, 3
      %p171 = pnand %p169, %p170
      %p172 = pneg %p171
      // Predicated region
      $region9: #{tpu_custom_call.1} parent=5 // pred_check
        _
      $region10: #{tpu_custom_call.1} parent=5 // pred_check_branch
        %174 = sbr.rel (%p171) target = $region12
      $region11: #{tpu_custom_call.1} parent=5 // pred_region
        %s175 = ssub.s32 %s17, 1
        // Predicated region
        $region13: #{tpu_custom_call.1} parent=11 // pred_check
          %p176 = pneg %p81
        $region14: #{tpu_custom_call.1} parent=11 // pred_check_branch
          %178 = sbr.rel (%p176) target = $region16
        $region15: #{tpu_custom_call.1} parent=11 // pred_region
          %180 = vsyncadd [#allocation6], 0
          %s181 = smul.addr %s27, 8
          %s182 = scalar_lea.hbm %s1, %s181
          %s183 = sshll.u32 %s182, 4
          %s184 = int_to_ptr.hbm [resolvable:$true] %s183
          %s185 = sshll.u32 [#allocation5], 4
          %s186 = int_to_ptr.vmem [resolvable:$true] %s185
          %191 = dma.hbm_to_vmem [thread:$0]  %s184, 512, %s186, [#allocation6], 128, 128, 8
        $region16: #{tpu_custom_call.1} parent=11 // pred_fallthru
          _
        // Predicated region
        $region17: #{tpu_custom_call.1} parent=11 // pred_check
          %p192 = pneg %p107
        $region18: #{tpu_custom_call.1} parent=11 // pred_check_branch
          %194 = sbr.rel (%p192) target = $region20
        $region19: #{tpu_custom_call.1} parent=11 // pred_region
          %p195 = scmp.lt.s32.totalorder %s27, 0
          %s196 = scalar_select %p195, %s27, 0
          %s197 = scalar_lea.vmem %s2, %s196
        $region20: #{tpu_custom_call.1} parent=11 // pred_fallthru
          _
        // Predicated region
        $region21: #{tpu_custom_call.1} parent=11 // pred_check
          %p198 = pneg %p133
        $region22: #{tpu_custom_call.1} parent=11 // pred_check_branch
          %200 = sbr.rel (%p198) target = $region24
        $region23: #{tpu_custom_call.1} parent=11 // pred_region
          %202 = vsyncadd [#allocation6], 0
          %s203 = smul.addr %s27, 8
          %s204 = scalar_lea.hbm %s3, %s203
          %s205 = sshll.u32 %s204, 4
          %s206 = int_to_ptr.hbm [resolvable:$true] %s205
          %s207 = sshll.u32 [#allocation7], 4
          %s208 = int_to_ptr.vmem [resolvable:$true] %s207
          %213 = dma.hbm_to_vmem [thread:$0]  %s206, 512, %s208, [#allocation6], 128, 128, 8
        $region24: #{tpu_custom_call.1} parent=11 // pred_fallthru
          _
      $region12: #{tpu_custom_call.1} parent=5 // pred_fallthru
        _
      %p214 = scmp.lt.s32.totalorder %s17, 2
      // Predicated region
      $region25: #{tpu_custom_call.1} parent=5 // pred_check
        %p215 = pneg %p214
      $region26: #{tpu_custom_call.1} parent=5 // pred_check_branch
        %217 = sbr.rel (%p215) target = $region28
      $region27: #{tpu_custom_call.1} parent=5 // pred_region
        // Predicated region
        $region29: #{tpu_custom_call.1} parent=27 // pred_check
          %p218 = pneg %p49
        $region30: #{tpu_custom_call.1} parent=27 // pred_check_branch
          %220 = sbr.rel (%p218) target = $region32
        $region31: #{tpu_custom_call.1} parent=27 // pred_region
          %s221 = sand.u32 %s39, 1
          %s222 = scalar_lea.sflag [#allocation3], %s221
          %s223 = sand.u32 %s39, 1
          %s224 = smul.addr %s223, 32
          %s225 = scalar_lea.vmem [#allocation2], %s224
          %s226 = smul.u32 4, %s24
          %228 = vsyncadd %s222, 0
          %s229 = smul.addr %s226, 8
          %s230 = scalar_lea.hbm %s0, %s229
          %s231 = sshll.u32 %s230, 4
          %s232 = int_to_ptr.hbm [resolvable:$true] %s231
          %s233 = sshll.u32 %s225, 4
          %s234 = int_to_ptr.vmem [resolvable:$true] %s233
          %239 = dma.hbm_to_vmem [thread:$0]  %s232, 512, %s234, %s222, 128, 128, 8
        $region32: #{tpu_custom_call.1} parent=27 // pred_fallthru
          _
      $region28: #{tpu_custom_call.1} parent=5 // pred_fallthru
        _
      %p240 = scmp.le.s32.totalorder 1, %s17
      %p241 = scmp.lt.s32.totalorder %s17, 3
      %p242 = pnand %p240, %p241
      %p243 = pneg %p242
      // Predicated region
      $region33: #{tpu_custom_call.1} parent=5 // pred_check
        _
      $region34: #{tpu_custom_call.1} parent=5 // pred_check_branch
        %245 = sbr.rel (%p242) target = $region36
      $region35: #{tpu_custom_call.1} parent=5 // pred_region
        %s246 = ssub.s32 %s17, 1
        %s247 = sand.u32 %s42, 1
        %s248 = scalar_lea.sflag [#allocation3], %s247
        %s249 = sand.u32 %s42, 1
        %s250 = smul.addr %s249, 32
        %s251 = scalar_lea.vmem [#allocation2], %s250
        // Predicated region
        $region37: #{tpu_custom_call.1} parent=35 // pred_check
          %p252 = pneg %p55
        $region38: #{tpu_custom_call.1} parent=35 // pred_check_branch
          %254 = sbr.rel (%p252) target = $region40
        $region39: #{tpu_custom_call.1} parent=35 // pred_region
          %256 = dma.done %s248, 512
        $region40: #{tpu_custom_call.1} parent=35 // pred_fallthru
          _
        // Predicated region
        $region41: #{tpu_custom_call.1} parent=35 // pred_check
          %p257 = pneg %p81
        $region42: #{tpu_custom_call.1} parent=35 // pred_check_branch
          %259 = sbr.rel (%p257) target = $region44
        $region43: #{tpu_custom_call.1} parent=35 // pred_region
          %261 = dma.done [#allocation6], 512
        $region44: #{tpu_custom_call.1} parent=35 // pred_fallthru
          _
        // Predicated region
        $region45: #{tpu_custom_call.1} parent=35 // pred_check
          %p262 = pneg %p133
        $region46: #{tpu_custom_call.1} parent=35 // pred_check_branch
          %264 = sbr.rel (%p262) target = $region48
        $region47: #{tpu_custom_call.1} parent=35 // pred_region
          %266 = dma.done [#allocation6], 512
        $region48: #{tpu_custom_call.1} parent=35 // pred_fallthru
          _
        %s267 = sand.u32 %s42, 1
        %s268 = scalar_lea.sflag [#allocation3], %s267
        %s269 = sand.u32 %s42, 1
        %s270 = smul.addr %s269, 32
        %s271 = scalar_lea.vmem [#allocation2], %s270
        %p272 = pneg %p55
        %p273 = pneg %p52
        %p274 = pneg %p81
        %p275 = pneg %p78
        %p276 = scmp.lt.s32.totalorder %s27, 0
        %s277 = scalar_select %p276, %s27, 0
        %s278 = scalar_lea.vmem %s2, %s277
        %p279 = pneg %p107
        %p280 = pneg %p104
        %p281 = pneg %p133
        %p282 = pneg %p130
        %p283 = pneg %p161
        %p284 = pneg %p158
        %s285 = sand.u32 %s148, 1
        %s286 = scalar_lea.sflag [#allocation4], %s285
        %s287 = sand.u32 %s148, 1
        %s288 = smul.addr %s287, 32
        %s289 = scalar_lea.vmem [#allocation8], %s288
        %s290 = smul.u32 4, %s26
        %p291 = scmp.lt.s32.totalorder %s27, 0
        %s292 = scalar_select %p291, %s27, 0
        %s293 = scalar_lea.vmem %s2, %s292
        %s294 = smul.u32 4, %s26
        %v295 = vld [vmem:[%s251] sm:$0xff]
        %v296 = vld [vmem:[%s251 + $0x8] sm:$0xff]
        %v297 = vld [vmem:[%s251 + $0x10] sm:$0xff]
        %v298 = vld [vmem:[%s251 + $0x18] sm:$0xff]
        %vm299 = vcmask 261120
        %v300 = vsel %vm299, %v295, -inf
        %v301 = vrot.slane %v300, 4
        %v302 = vmax.f32 %v300, %v301
        %v303 = vrot.slane %v302, 2
        %v304 = vmax.f32 %v302, %v303
        %v305 = vrot.slane %v304, 1
        %v306 = vmax.f32 %v304, %v305
        %v307 = vsel %vm299, %v296, -inf
        %v308 = vrot.slane %v307, 4
        %v309 = vmax.f32 %v307, %v308
        %v310 = vrot.slane %v309, 2
        %v311 = vmax.f32 %v309, %v310
        %v312 = vrot.slane %v311, 1
        %v313 = vmax.f32 %v311, %v312
        %v314 = vsel %vm299, %v297, -inf
        %v315 = vrot.slane %v314, 4
        %v316 = vmax.f32 %v314, %v315
        %v317 = vrot.slane %v316, 2
        %v318 = vmax.f32 %v316, %v317
        %v319 = vrot.slane %v318, 1
        %v320 = vmax.f32 %v318, %v319
        %v321 = vsel %vm299, %v298, -inf
        %v322 = vrot.slane %v321, 4
        %v323 = vmax.f32 %v321, %v322
        %v324 = vrot.slane %v323, 2
        %v325 = vmax.f32 %v323, %v324
        %v326 = vrot.slane %v325, 1
        %v327 = vmax.f32 %v325, %v326
        %v328 = vld [vmem:[#allocation7] sm:$0xff]
        %v329 = vld [vmem:[#allocation7 + $0x8] sm:$0xff]
        %v330 = vld [vmem:[#allocation7 + $0x10] sm:$0xff]
        %v331 = vld [vmem:[#allocation7 + $0x18] sm:$0xff]
        %vm336 = vcmask 1041409
        %v337 = vsel %vm336, %v313, %v306
        %vm338 = vcmask 1042434
        %v339 = vsel %vm338, %v320, %v337
        %vm340 = vcmask 1043459
        %v341 = vsel %vm340, %v327, %v339
        %v342 = vsel %vm299, %v341, 0
        %344 = vmatpush.msra.mxu0 0.0
        %345 = vmatpush.msra.mxu0 0.0
        %346 = vmatpush.msra.mxu0 0.0
        %347 = vmatpush.msra.mxu0 0.0
        %348 = vmatpush.msra.mxu0 0.0
        %349 = vmatpush.msra.mxu0 0.0
        %350 = vmatpush.msra.mxu0 0.0
        %351 = vmatpush.msra.mxu0 0.0
        %352 = vmatpush.msra.mxu0 0.0
        %353 = vmatpush.msra.mxu0 0.0
        %354 = vmatpush.msra.mxu0 0.0
        %355 = vmatpush.msra.mxu0 0.0
        %356 = vmatpush.msra.mxu0 %v331
        %357 = vmatpush.msra.mxu0 %v330
        %358 = vmatpush.msra.mxu0 %v329
        %359 = vmatpush.msra.mxu0 %v328
        %360 = vmatmul.f32.gmra.mxu0 %v342
        %v361 = vpop.f32.mrf.mxu0
        %v362 = vadd.f32 0.0, %v361
        %363 = vdwg.mxu0
        %v364 = vld [vmem:[#allocation5] sm:$0xff]
        %v365 = vld [vmem:[#allocation5 + $0x8] sm:$0xff]
        %v366 = vld [vmem:[#allocation5 + $0x10] sm:$0xff]
        %v367 = vld [vmem:[#allocation5 + $0x18] sm:$0xff]
        %v369 = vsel %vm299, %v295, 0
        %v372 = vsel %vm299, %v296, 0
        %v375 = vsel %vm299, %v297, 0
        %v378 = vsel %vm299, %v298, 0
        %380 = vmatpush.msra.mxu0 0.0
        %381 = vmatpush.msra.mxu0 0.0
        %382 = vmatpush.msra.mxu0 0.0
        %383 = vmatpush.msra.mxu0 0.0
        %384 = vmatpush.msra.mxu0 0.0
        %385 = vmatpush.msra.mxu0 0.0
        %386 = vmatpush.msra.mxu0 0.0
        %387 = vmatpush.msra.mxu0 0.0
        %388 = vmatpush.msra.mxu0 0.0
        %389 = vmatpush.msra.mxu0 0.0
        %390 = vmatpush.msra.mxu0 0.0
        %391 = vmatpush.msra.mxu0 0.0
        %392 = vmatpush.msra.mxu0 %v367
        %393 = vmatpush.msra.mxu0 %v366
        %394 = vmatpush.msra.mxu0 %v365
        %395 = vmatpush.msra.mxu0 %v364
        %396 = vmatmul.f32.gmra.mxu0 %v369
        %v397 = vpop.f32.mrf.mxu0
        %v398 = vadd.f32 0.0, %v397
        %399 = vmatmul.f32.gmra.mxu0 %v372
        %v400 = vpop.f32.mrf.mxu0
        %v401 = vadd.f32 0.0, %v400
        %402 = vmatmul.f32.gmra.mxu0 %v375
        %v403 = vpop.f32.mrf.mxu0
        %v404 = vadd.f32 0.0, %v403
        %405 = vmatmul.f32.gmra.mxu0 %v378
        %v406 = vpop.f32.mrf.mxu0
        %v407 = vadd.f32 0.0, %v406
        %408 = vdwg.mxu0
        %v409 = vld [vmem:[%s293] sm:$0x1]
        %v411 = vperm.slane %v409, 0
        %v413 = vadd.f32 %v398, %v411
        %v414 = vadd.f32 %v401, %v411
        %v415 = vadd.f32 %v404, %v411
        %v416 = vadd.f32 %v407, %v411
        %v418 = vrot.slane %v362, 1
        %v419 = vrot.slane %v362, 2
        %v420 = vrot.slane %v362, 3
        %v421 = vperm.slane %v362, 0
        %v422 = vperm.slane %v418, 0
        %v423 = vperm.slane %v419, 0
        %v424 = vperm.slane %v420, 0
        %v429 = vsub.f32 %v413, %v421
        %v430 = vsub.f32 %v414, %v422
        %v431 = vsub.f32 %v415, %v423
        %v432 = vsub.f32 %v416, %v424
        %433 = vst.msk [vmem:[%s289] sm:$0xff] %vm299, %v429
        %434 = vst.msk [vmem:[%s289 + $0x8] sm:$0xff] %vm299, %v430
        %435 = vst.msk [vmem:[%s289 + $0x10] sm:$0xff] %vm299, %v431
        %436 = vst.msk [vmem:[%s289 + $0x18] sm:$0xff] %vm299, %v432
        %s437 = sand.u32 %s148, 1
        %s438 = scalar_lea.sflag [#allocation4], %s437
        %s439 = sand.u32 %s148, 1
        %s440 = smul.addr %s439, 32
        %s441 = scalar_lea.vmem [#allocation8], %s440
        // Predicated region
        $region49: #{tpu_custom_call.1} parent=35 // pred_check
          %p442 = pneg %p158
        $region50: #{tpu_custom_call.1} parent=35 // pred_check_branch
          %444 = sbr.rel (%p442) target = $region52
        $region51: #{tpu_custom_call.1} parent=35 // pred_region
          %s445 = smul.u32 4, %s26
          %447 = vsyncadd %s438, 0
          %s448 = sadd.s32 %s27, %s445
          %s449 = smul.addr %s448, 8
          %s450 = scalar_lea.hbm %s4, %s449
          %s451 = sshll.u32 %s441, 4
          %s452 = int_to_ptr.vmem [resolvable:$true] %s451
          %s453 = sshll.u32 %s450, 4
          %s454 = int_to_ptr.hbm [resolvable:$true] %s453
          %459 = dma.vmem_to_hbm [thread:$0]  %s452, 512, %s454, %s438, 128, 128, 8
        $region52: #{tpu_custom_call.1} parent=35 // pred_fallthru
          _
      $region36: #{tpu_custom_call.1} parent=5 // pred_fallthru
        _
      %p460 = scmp.le.s32.totalorder 2, %s17
      // Predicated region
      $region53: #{tpu_custom_call.1} parent=5 // pred_check
        %p461 = pneg %p460
      $region54: #{tpu_custom_call.1} parent=5 // pred_check_branch
        %463 = sbr.rel (%p461) target = $region56
      $region55: #{tpu_custom_call.1} parent=5 // pred_region
        %s464 = ssub.s32 %s17, 2
        // Predicated region
        $region57: #{tpu_custom_call.1} parent=55 // pred_check
          %p465 = pneg %p164
        $region58: #{tpu_custom_call.1} parent=55 // pred_check_branch
          %467 = sbr.rel (%p465) target = $region60
        $region59: #{tpu_custom_call.1} parent=55 // pred_region
          %s468 = sand.u32 %s149, 1
          %s469 = scalar_lea.sflag [#allocation4], %s468
          %s470 = sand.u32 %s149, 1
          %s471 = smul.addr %s470, 32
          %s472 = scalar_lea.vmem [#allocation8], %s471
          %474 = dma.done %s469, 512
        $region60: #{tpu_custom_call.1} parent=55 // pred_fallthru
          _
      $region56: #{tpu_custom_call.1} parent=5 // pred_fallthru
        _
    $region6: #{tpu_custom_call.1} parent=1 // loop_footer
      %s21 = sadd.s32 1, %s17
    $region7: #{tpu_custom_call.1} parent=1 // loop_footer_branch
      %16 = sbr.rel target = $region3
    $region8: #{tpu_custom_call.1} parent=1 // loop_exit
      _
    %475 = vsyncpa [#allocation3], 1
    %s476 = scalar_lea.sflag [#allocation3], 1
    %477 = vsyncpa %s476, 1
    %478 = vsyncpa [#allocation6], 1
    %479 = vsyncpa [#allocation4], 1
    %s480 = scalar_lea.sflag [#allocation4], 1
    %481 = vsyncpa %s480, 1

// kernel: tpu_custom_call.1
$region0: #{tpu_custom_call.1}
  #allocation0 [shape = 'u32[]', space=smem, size = 0x4, offset = 0x4, fixed_abs, tag = 'smem constant byte address 0x4 - core index']
  #allocation1 [shape = 'u32[72,128]{1,0:T(1,128)}', space=vmem, size = 0x9000, scoped, tag = 'internal scratch']
  %s0 = inlined_call_operand.hbm [shape: f32[8,8,32], index: 0, kind: input, shape index: {}]
  %s1 = inlined_call_operand.hbm [shape: f32[32,32], index: 1, kind: input, shape index: {}]
  %s2 = inlined_call_operand.vmem [shape: f32[1,32], index: 2, kind: input, shape index: {}]
  %s3 = inlined_call_operand.hbm [shape: f32[32,32], index: 3, kind: input, shape index: {}]
  %s4 = inlined_call_operand.hbm [shape: f32[8,8,32], index: 4, kind: output, shape index: {}]
  %s5 = sld [smem:[#allocation0]]
  $region61: #{tpu_custom_call.1} parent=0
    _
  %s7 = ssub.s32 1, %s5
  %s8 = scalar_select 0, %s7, %s5
  $region1: #{tpu_custom_call.1} parent=0
    #allocation2 [shape = 'u8[32768]{0}', space=vmem, size = 0x8000, scoped, tag = 'input window, operand 0']
    #allocation3 [shape = 's32[2]{0}', space=sflag, size = 0x8, scoped, tag = 'scoped memory for tpu_custom_call.1']
    #allocation4 [shape = 's32[2]{0}', space=sflag, size = 0x8, scoped, tag = 'scoped memory for tpu_custom_call.1']
    #allocation5 [shape = 'u8[16384]{0}', space=vmem, size = 0x4000, scoped, tag = 'input window, operand 1, single buffered']
    #allocation6 [shape = 's32[1]{0}', space=sflag, size = 0x4, scoped, tag = 'scoped memory for tpu_custom_call.1']
    #allocation7 [shape = 'u8[16384]{0}', space=vmem, size = 0x4000, scoped, tag = 'input window, operand 3, single buffered']
    #allocation8 [shape = 'u8[32768]{0}', space=vmem, size = 0x8000, scoped, tag = 'output window, operand 0']
    %9 = vsyncpa [#allocation3], 0
    %s10 = scalar_lea.sflag [#allocation3], 1
    %11 = vsyncpa %s10, 0
    %12 = vsyncpa [#allocation6], 0
    %13 = vsyncpa [#allocation4], 0
    %s14 = scalar_lea.sflag [#allocation4], 1
    %15 = vsyncpa %s14, 0
    loop: start=0, step=1, limit=4
    $region2: #{tpu_custom_call.1} parent=1 // loop_pre_header
      _
    $region3: #{tpu_custom_call.1} parent=1 // loop_header
      %s17 = sphi 0, %s21
      %p18 = scmp.ge.s32.totalorder %s17, 4
      %s24 = sphi 0, %s36
      %s25 = sphi 0, %s32
      %s26 = sphi 0, %s24
      %s27 = sphi 0, %s25
      %s28 = sphi 0, %s26
      %s29 = sphi 0, %s27
      %s39 = sphi 0, %s41
      %s42 = sphi 0, %s39
      %s43 = sphi 0, %s42
      %s59 = sphi 0, %s43
      %s65 = sphi 0, %s67
      %s68 = sphi 0, %s65
      %s69 = sphi 0, %s68
      %s85 = sphi 0, %s69
      %s91 = sphi 0, %s93
      %s94 = sphi 0, %s91
      %s95 = sphi 0, %s94
      %s111 = sphi 0, %s95
      %s117 = sphi 0, %s119
      %s120 = sphi 0, %s117
      %s121 = sphi 0, %s120
      %s137 = sphi 0, %s121
      %s145 = sphi 0, %s147
      %s148 = sphi 0, %s145
      %s149 = sphi 0, %s148
      %s165 = sphi 0, %s149
    $region4: #{tpu_custom_call.1} parent=1 // loop_header_branch
      %20 = sbr.rel (%p18) target = $region8
    $region5: #{tpu_custom_call.1} parent=1 // loop_body
      %s22 = ssub.s32 %s17, 1
      %s23 = ssub.s32 %s17, 2
      %s30 = sadd.s32 1, %s25
      %p31 = scmp.ge.s32.totalorder %s30, 1
      %s32 = scalar_select %p31, 0, %s30
      %s33 = sadd.s32 1, %s24
      %s34 = scalar_select %p31, %s33, %s24
      %p35 = scmp.ge.s32.totalorder %s34, 2
      %s36 = scalar_select %p35, 0, %s34
      %s37 = ssub.s32 %s24, %s36
      %p38 = scmp.eq.s32.totalorder %s37, 0
      %s40 = sadd.s32 %s39, 1
      %s41 = scalar_select %p38, %s39, %s40
      %p44 = pneg %p38
      %p45 = scmp.eq.s32.totalorder %s17, 1
      %p46 = por %p44, %p45
      %p47 = scmp.ne.s32.totalorder %s39, %s42
      %p48 = scmp.eq.s32.totalorder %s17, 0
      %p49 = por %p47, %p48
      %p50 = scmp.ne.s32.totalorder %s39, %s42
      %p51 = scmp.eq.s32.totalorder %s22, 1
      %p52 = por %p50, %p51
      %p53 = scmp.ne.s32.totalorder %s42, %s43
      %p54 = scmp.eq.s32.totalorder %s22, 0
      %p55 = por %p53, %p54
      %p56 = scmp.ne.s32.totalorder %s42, %s43
      %p57 = scmp.eq.s32.totalorder %s23, 1
      %p58 = por %p56, %p57
      %p60 = scmp.ne.s32.totalorder %s43, %s59
      %p61 = scmp.eq.s32.totalorder %s23, 0
      %p62 = por %p60, %p61
      %s63 = ssub.s32 %s25, %s32
      %p64 = scmp.eq.s32.totalorder %s63, 0
      %s66 = sadd.s32 %s65, 1
      %s67 = scalar_select %p64, %s65, %s66
      %p70 = pneg %p64
      %p71 = scmp.eq.s32.totalorder %s17, 1
      %p72 = por %p70, %p71
      %p73 = scmp.ne.s32.totalorder %s65, %s68
      %p74 = scmp.eq.s32.totalorder %s17, 0
      %p75 = por %p73, %p74
      %p76 = scmp.ne.s32.totalorder %s65, %s68
      %p77 = scmp.eq.s32.totalorder %s22, 1
      %p78 = por %p76, %p77
      %p79 = scmp.ne.s32.totalorder %s68, %s69
      %p80 = scmp.eq.s32.totalorder %s22, 0
      %p81 = por %p79, %p80
      %p82 = scmp.ne.s32.totalorder %s68, %s69
      %p83 = scmp.eq.s32.totalorder %s23, 1
      %p84 = por %p82, %p83
      %p86 = scmp.ne.s32.totalorder %s69, %s85
      %p87 = scmp.eq.s32.totalorder %s23, 0
      %p88 = por %p86, %p87
      %s89 = ssub.s32 %s25, %s32
      %p90 = scmp.eq.s32.totalorder %s89, 0
      %s92 = sadd.s32 %s91, 1
      %s93 = scalar_select %p90, %s91, %s92
      %p96 = pneg %p90
      %p97 = scmp.eq.s32.totalorder %s17, 1
      %p98 = por %p96, %p97
      %p99 = scmp.ne.s32.totalorder %s91, %s94
      %p100 = scmp.eq.s32.totalorder %s17, 0
      %p101 = por %p99, %p100
      %p102 = scmp.ne.s32.totalorder %s91, %s94
      %p103 = scmp.eq.s32.totalorder %s22, 1
      %p104 = por %p102, %p103
      %p105 = scmp.ne.s32.totalorder %s94, %s95
      %p106 = scmp.eq.s32.totalorder %s22, 0
      %p107 = por %p105, %p106
      %p108 = scmp.ne.s32.totalorder %s94, %s95
      %p109 = scmp.eq.s32.totalorder %s23, 1
      %p110 = por %p108, %p109
      %p112 = scmp.ne.s32.totalorder %s95, %s111
      %p113 = scmp.eq.s32.totalorder %s23, 0
      %p114 = por %p112, %p113
      %s115 = ssub.s32 %s25, %s32
      %p116 = scmp.eq.s32.totalorder %s115, 0
      %s118 = sadd.s32 %s117, 1
      %s119 = scalar_select %p116, %s117, %s118
      %p122 = pneg %p116
      %p123 = scmp.eq.s32.totalorder %s17, 1
      %p124 = por %p122, %p123
      %p125 = scmp.ne.s32.totalorder %s117, %s120
      %p126 = scmp.eq.s32.totalorder %s17, 0
      %p127 = por %p125, %p126
      %p128 = scmp.ne.s32.totalorder %s117, %s120
      %p129 = scmp.eq.s32.totalorder %s22, 1
      %p130 = por %p128, %p129
      %p131 = scmp.ne.s32.totalorder %s120, %s121
      %p132 = scmp.eq.s32.totalorder %s22, 0
      %p133 = por %p131, %p132
      %p134 = scmp.ne.s32.totalorder %s120, %s121
      %p135 = scmp.eq.s32.totalorder %s23, 1
      %p136 = por %p134, %p135
      %p138 = scmp.ne.s32.totalorder %s121, %s137
      %p139 = scmp.eq.s32.totalorder %s23, 0
      %p140 = por %p138, %p139
      %s141 = ssub.s32 %s24, %s36
      %s142 = ssub.s32 %s25, %s32
      %s143 = sor.u32 %s141, %s142
      %p144 = scmp.eq.s32.totalorder %s143, 0
      %s146 = sadd.s32 %s145, 1
      %s147 = scalar_select %p144, %s145, %s146
      %p150 = pneg %p144
      %p151 = scmp.eq.s32.totalorder %s17, 1
      %p152 = por %p150, %p151
      %p153 = scmp.ne.s32.totalorder %s145, %s148
      %p154 = scmp.eq.s32.totalorder %s17, 0
      %p155 = por %p153, %p154
      %p156 = scmp.ne.s32.totalorder %s145, %s148
      %p157 = scmp.eq.s32.totalorder %s22, 1
      %p158 = por %p156, %p157
      %p159 = scmp.ne.s32.totalorder %s148, %s149
      %p160 = scmp.eq.s32.totalorder %s22, 0
      %p161 = por %p159, %p160
      %p162 = scmp.ne.s32.totalorder %s148, %s149
      %p163 = scmp.eq.s32.totalorder %s23, 1
      %p164 = por %p162, %p163
      %p166 = scmp.ne.s32.totalorder %s149, %s165
      %p167 = scmp.eq.s32.totalorder %s23, 0
      %p168 = por %p166, %p167
      %p169 = scmp.le.s32.totalorder 1, %s17
      %p170 = scmp.lt.s32.totalorder %s17, 3
      %p171 = pnand %p169, %p170
      %p172 = pneg %p171
      // Predicated region
      $region9: #{tpu_custom_call.1} parent=5 // pred_check
        _
      $region10: #{tpu_custom_call.1} parent=5 // pred_check_branch
        %174 = sbr.rel (%p171) target = $region12
      $region11: #{tpu_custom_call.1} parent=5 // pred_region
        %s175 = ssub.s32 %s17, 1
        // Predicated region
        $region13: #{tpu_custom_call.1} parent=11 // pred_check
          %p176 = pneg %p81
        $region14: #{tpu_custom_call.1} parent=11 // pred_check_branch
          %178 = sbr.rel (%p176) target = $region16
        $region15: #{tpu_custom_call.1} parent=11 // pred_region
          %180 = vsyncadd [#allocation6], 0
          %s181 = smul.addr %s27, 8
          %s182 = scalar_lea.hbm %s1, %s181
          %s183 = sshll.u32 %s182, 4
          %s184 = int_to_ptr.hbm [resolvable:$true] %s183
          %s185 = sshll.u32 [#allocation5], 4
          %s186 = int_to_ptr.vmem [resolvable:$true] %s185
          %191 = dma.hbm_to_vmem [thread:$0]  %s184, 512, %s186, [#allocation6], 128, 128, 8
        $region16: #{tpu_custom_call.1} parent=11 // pred_fallthru
          _
        // Predicated region
        $region17: #{tpu_custom_call.1} parent=11 // pred_check
          %p192 = pneg %p107
        $region18: #{tpu_custom_call.1} parent=11 // pred_check_branch
          %194 = sbr.rel (%p192) target = $region20
        $region19: #{tpu_custom_call.1} parent=11 // pred_region
          %p195 = scmp.lt.s32.totalorder %s27, 0
          %s196 = scalar_select %p195, %s27, 0
          %s197 = scalar_lea.vmem %s2, %s196
        $region20: #{tpu_custom_call.1} parent=11 // pred_fallthru
          _
        // Predicated region
        $region21: #{tpu_custom_call.1} parent=11 // pred_check
          %p198 = pneg %p133
        $region22: #{tpu_custom_call.1} parent=11 // pred_check_branch
          %200 = sbr.rel (%p198) target = $region24
        $region23: #{tpu_custom_call.1} parent=11 // pred_region
          %202 = vsyncadd [#allocation6], 0
          %s203 = smul.addr %s27, 8
          %s204 = scalar_lea.hbm %s3, %s203
          %s205 = sshll.u32 %s204, 4
          %s206 = int_to_ptr.hbm [resolvable:$true] %s205
          %s207 = sshll.u32 [#allocation7], 4
          %s208 = int_to_ptr.vmem [resolvable:$true] %s207
          %213 = dma.hbm_to_vmem [thread:$0]  %s206, 512, %s208, [#allocation6], 128, 128, 8
        $region24: #{tpu_custom_call.1} parent=11 // pred_fallthru
          _
      $region12: #{tpu_custom_call.1} parent=5 // pred_fallthru
        _
      %p214 = scmp.lt.s32.totalorder %s17, 2
      // Predicated region
      $region25: #{tpu_custom_call.1} parent=5 // pred_check
        %p215 = pneg %p214
      $region26: #{tpu_custom_call.1} parent=5 // pred_check_branch
        %217 = sbr.rel (%p215) target = $region28
      $region27: #{tpu_custom_call.1} parent=5 // pred_region
        // Predicated region
        $region29: #{tpu_custom_call.1} parent=27 // pred_check
          %p218 = pneg %p49
        $region30: #{tpu_custom_call.1} parent=27 // pred_check_branch
          %220 = sbr.rel (%p218) target = $region32
        $region31: #{tpu_custom_call.1} parent=27 // pred_region
          %s221 = sand.u32 %s39, 1
          %s222 = scalar_lea.sflag [#allocation3], %s221
          %s223 = sand.u32 %s39, 1
          %s224 = smul.addr %s223, 32
          %s225 = scalar_lea.vmem [#allocation2], %s224
          %s226 = smul.u32 4, %s24
          %228 = vsyncadd %s222, 0
          %s229 = smul.addr %s226, 8
          %s230 = scalar_lea.hbm %s0, %s229
          %s231 = sshll.u32 %s230, 4
          %s232 = int_to_ptr.hbm [resolvable:$true] %s231
          %s233 = sshll.u32 %s225, 4
          %s234 = int_to_ptr.vmem [resolvable:$true] %s233
          %239 = dma.hbm_to_vmem [thread:$0]  %s232, 512, %s234, %s222, 128, 128, 8
        $region32: #{tpu_custom_call.1} parent=27 // pred_fallthru
          _
      $region28: #{tpu_custom_call.1} parent=5 // pred_fallthru
        _
      %p240 = scmp.le.s32.totalorder 1, %s17
      %p241 = scmp.lt.s32.totalorder %s17, 3
      %p242 = pnand %p240, %p241
      %p243 = pneg %p242
      // Predicated region
      $region33: #{tpu_custom_call.1} parent=5 // pred_check
        _
      $region34: #{tpu_custom_call.1} parent=5 // pred_check_branch
        %245 = sbr.rel (%p242) target = $region36
      $region35: #{tpu_custom_call.1} parent=5 // pred_region
        %s246 = ssub.s32 %s17, 1
        %s247 = sand.u32 %s42, 1
        %s248 = scalar_lea.sflag [#allocation3], %s247
        %s249 = sand.u32 %s42, 1
        %s250 = smul.addr %s249, 32
        %s251 = scalar_lea.vmem [#allocation2], %s250
        // Predicated region
        $region37: #{tpu_custom_call.1} parent=35 // pred_check
          %p252 = pneg %p55
        $region38: #{tpu_custom_call.1} parent=35 // pred_check_branch
          %254 = sbr.rel (%p252) target = $region40
        $region39: #{tpu_custom_call.1} parent=35 // pred_region
          %256 = dma.done %s248, 512
        $region40: #{tpu_custom_call.1} parent=35 // pred_fallthru
          _
        // Predicated region
        $region41: #{tpu_custom_call.1} parent=35 // pred_check
          %p257 = pneg %p81
        $region42: #{tpu_custom_call.1} parent=35 // pred_check_branch
          %259 = sbr.rel (%p257) target = $region44
        $region43: #{tpu_custom_call.1} parent=35 // pred_region
          %261 = dma.done [#allocation6], 512
        $region44: #{tpu_custom_call.1} parent=35 // pred_fallthru
          _
        // Predicated region
        $region45: #{tpu_custom_call.1} parent=35 // pred_check
          %p262 = pneg %p133
        $region46: #{tpu_custom_call.1} parent=35 // pred_check_branch
          %264 = sbr.rel (%p262) target = $region48
        $region47: #{tpu_custom_call.1} parent=35 // pred_region
          %266 = dma.done [#allocation6], 512
        $region48: #{tpu_custom_call.1} parent=35 // pred_fallthru
          _
        %s267 = sand.u32 %s42, 1
        %s268 = scalar_lea.sflag [#allocation3], %s267
        %s269 = sand.u32 %s42, 1
        %s270 = smul.addr %s269, 32
        %s271 = scalar_lea.vmem [#allocation2], %s270
        %p272 = pneg %p55
        %p273 = pneg %p52
        %p274 = pneg %p81
        %p275 = pneg %p78
        %p276 = scmp.lt.s32.totalorder %s27, 0
        %s277 = scalar_select %p276, %s27, 0
        %s278 = scalar_lea.vmem %s2, %s277
        %p279 = pneg %p107
        %p280 = pneg %p104
        %p281 = pneg %p133
        %p282 = pneg %p130
        %p283 = pneg %p161
        %p284 = pneg %p158
        %s285 = sand.u32 %s148, 1
        %s286 = scalar_lea.sflag [#allocation4], %s285
        %s287 = sand.u32 %s148, 1
        %s288 = smul.addr %s287, 32
        %s289 = scalar_lea.vmem [#allocation8], %s288
        %s290 = smul.u32 4, %s26
        %p291 = scmp.lt.s32.totalorder %s27, 0
        %s292 = scalar_select %p291, %s27, 0
        %s293 = scalar_lea.vmem %s2, %s292
        %s294 = smul.u32 4, %s26
        %v295 = vld [vmem:[%s251] sm:$0xff]
        %v296 = vld [vmem:[%s251 + $0x8] sm:$0xff]
        %v297 = vld [vmem:[%s251 + $0x10] sm:$0xff]
        %v298 = vld [vmem:[%s251 + $0x18] sm:$0xff]
        %vm299 = vcmask 261120
        %v300 = vsel %vm299, %v295, -inf
        %v301 = vrot.slane %v300, 4
        %v302 = vmax.f32 %v300, %v301
        %v303 = vrot.slane %v302, 2
        %v304 = vmax.f32 %v302, %v303
        %v305 = vrot.slane %v304, 1
        %v306 = vmax.f32 %v304, %v305
        %v307 = vsel %vm299, %v296, -inf
        %v308 = vrot.slane %v307, 4
        %v309 = vmax.f32 %v307, %v308
        %v310 = vrot.slane %v309, 2
        %v311 = vmax.f32 %v309, %v310
        %v312 = vrot.slane %v311, 1
        %v313 = vmax.f32 %v311, %v312
        %v314 = vsel %vm299, %v297, -inf
        %v315 = vrot.slane %v314, 4
        %v316 = vmax.f32 %v314, %v315
        %v317 = vrot.slane %v316, 2
        %v318 = vmax.f32 %v316, %v317
        %v319 = vrot.slane %v318, 1
        %v320 = vmax.f32 %v318, %v319
        %v321 = vsel %vm299, %v298, -inf
        %v322 = vrot.slane %v321, 4
        %v323 = vmax.f32 %v321, %v322
        %v324 = vrot.slane %v323, 2
        %v325 = vmax.f32 %v323, %v324
        %v326 = vrot.slane %v325, 1
        %v327 = vmax.f32 %v325, %v326
        %v328 = vld [vmem:[#allocation7] sm:$0xff]
        %v329 = vld [vmem:[#allocation7 + $0x8] sm:$0xff]
        %v330 = vld [vmem:[#allocation7 + $0x10] sm:$0xff]
        %v331 = vld [vmem:[#allocation7 + $0x18] sm:$0xff]
        %vm336 = vcmask 1041409
        %v337 = vsel %vm336, %v313, %v306
        %vm338 = vcmask 1042434
        %v339 = vsel %vm338, %v320, %v337
        %vm340 = vcmask 1043459
        %v341 = vsel %vm340, %v327, %v339
        %v342 = vsel %vm299, %v341, 0
        %344 = vmatpush.msra.mxu0 0.0
        %345 = vmatpush.msra.mxu0 0.0
        %346 = vmatpush.msra.mxu0 0.0
        %347 = vmatpush.msra.mxu0 0.0
        %348 = vmatpush.msra.mxu0 0.0
        %349 = vmatpush.msra.mxu0 0.0
        %350 = vmatpush.msra.mxu0 0.0
        %351 = vmatpush.msra.mxu0 0.0
        %352 = vmatpush.msra.mxu0 0.0
        %353 = vmatpush.msra.mxu0 0.0
        %354 = vmatpush.msra.mxu0 0.0
        %355 = vmatpush.msra.mxu0 0.0
        %356 = vmatpush.msra.mxu0 %v331
        %357 = vmatpush.msra.mxu0 %v330
        %358 = vmatpush.msra.mxu0 %v329
        %359 = vmatpush.msra.mxu0 %v328
        %360 = vmatmul.f32.gmra.mxu0 %v342
        %v361 = vpop.f32.mrf.mxu0
        %v362 = vadd.f32 0.0, %v361
        %363 = vdwg.mxu0
        %v364 = vld [vmem:[#allocation5] sm:$0xff]
        %v365 = vld [vmem:[#allocation5 + $0x8] sm:$0xff]
        %v366 = vld [vmem:[#allocation5 + $0x10] sm:$0xff]
        %v367 = vld [vmem:[#allocation5 + $0x18] sm:$0xff]
        %v369 = vsel %vm299, %v295, 0
        %v372 = vsel %vm299, %v296, 0
        %v375 = vsel %vm299, %v297, 0
        %v378 = vsel %vm299, %v298, 0
        %380 = vmatpush.msra.mxu0 0.0
        %381 = vmatpush.msra.mxu0 0.0
        %382 = vmatpush.msra.mxu0 0.0
        %383 = vmatpush.msra.mxu0 0.0
        %384 = vmatpush.msra.mxu0 0.0
        %385 = vmatpush.msra.mxu0 0.0
        %386 = vmatpush.msra.mxu0 0.0
        %387 = vmatpush.msra.mxu0 0.0
        %388 = vmatpush.msra.mxu0 0.0
        %389 = vmatpush.msra.mxu0 0.0
        %390 = vmatpush.msra.mxu0 0.0
        %391 = vmatpush.msra.mxu0 0.0
        %392 = vmatpush.msra.mxu0 %v367
        %393 = vmatpush.msra.mxu0 %v366
        %394 = vmatpush.msra.mxu0 %v365
        %395 = vmatpush.msra.mxu0 %v364
        %396 = vmatmul.f32.gmra.mxu0 %v369
        %v397 = vpop.f32.mrf.mxu0
        %v398 = vadd.f32 0.0, %v397
        %399 = vmatmul.f32.gmra.mxu0 %v372
        %v400 = vpop.f32.mrf.mxu0
        %v401 = vadd.f32 0.0, %v400
        %402 = vmatmul.f32.gmra.mxu0 %v375
        %v403 = vpop.f32.mrf.mxu0
        %v404 = vadd.f32 0.0, %v403
        %405 = vmatmul.f32.gmra.mxu0 %v378
        %v406 = vpop.f32.mrf.mxu0
        %v407 = vadd.f32 0.0, %v406
        %408 = vdwg.mxu0
        %v409 = vld [vmem:[%s293] sm:$0x1]
        %v411 = vperm.slane %v409, 0
        %v413 = vadd.f32 %v398, %v411
        %v414 = vadd.f32 %v401, %v411
        %v415 = vadd.f32 %v404, %v411
        %v416 = vadd.f32 %v407, %v411
        %v418 = vrot.slane %v362, 1
        %v419 = vrot.slane %v362, 2
        %v420 = vrot.slane %v362, 3
        %v421 = vperm.slane %v362, 0
        %v422 = vperm.slane %v418, 0
        %v423 = vperm.slane %v419, 0
        %v424 = vperm.slane %v420, 0
        %v429 = vsub.f32 %v413, %v421
        %v430 = vsub.f32 %v414, %v422
        %v431 = vsub.f32 %v415, %v423
        %v432 = vsub.f32 %v416, %v424
        %433 = vst.msk [vmem:[%s289] sm:$0xff] %vm299, %v429
        %434 = vst.msk [vmem:[%s289 + $0x8] sm:$0xff] %vm299, %v430
        %435 = vst.msk [vmem:[%s289 + $0x10] sm:$0xff] %vm299, %v431
        %436 = vst.msk [vmem:[%s289 + $0x18] sm:$0xff] %vm299, %v432
        %s437 = sand.u32 %s148, 1
        %s438 = scalar_lea.sflag [#allocation4], %s437
        %s439 = sand.u32 %s148, 1
        %s440 = smul.addr %s439, 32
        %s441 = scalar_lea.vmem [#allocation8], %s440
        // Predicated region
        $region49: #{tpu_custom_call.1} parent=35 // pred_check
          %p442 = pneg %p158
        $region50: #{tpu_custom_call.1} parent=35 // pred_check_branch
          %444 = sbr.rel (%p442) target = $region52
        $region51: #{tpu_custom_call.1} parent=35 // pred_region
          %s445 = smul.u32 4, %s26
          %447 = vsyncadd %s438, 0
          %s448 = sadd.s32 %s27, %s445
          %s449 = smul.addr %s448, 8
          %s450 = scalar_lea.hbm %s4, %s449
          %s451 = sshll.u32 %s441, 4
          %s452 = int_to_ptr.vmem [resolvable:$true] %s451
          %s453 = sshll.u32 %s450, 4
          %s454 = int_to_ptr.hbm [resolvable:$true] %s453
          %459 = dma.vmem_to_hbm [thread:$0]  %s452, 512, %s454, %s438, 128, 128, 8
        $region52: #{tpu_custom_call.1} parent=35 // pred_fallthru
          _
      $region36: #{tpu_custom_call.1} parent=5 // pred_fallthru
        _
      %p460 = scmp.le.s32.totalorder 2, %s17
      // Predicated region
      $region53: #{tpu_custom_call.1} parent=5 // pred_check
        %p461 = pneg %p460
      $region54: #{tpu_custom_call.1} parent=5 // pred_check_branch
        %463 = sbr.rel (%p461) target = $region56
      $region55: #{tpu_custom_call.1} parent=5 // pred_region
        %s464 = ssub.s32 %s17, 2
        // Predicated region
        $region57: #{tpu_custom_call.1} parent=55 // pred_check
          %p465 = pneg %p164
        $region58: #{tpu_custom_call.1} parent=55 // pred_check_branch
          %467 = sbr.rel (%p465) target = $region60
        $region59: #{tpu_custom_call.1} parent=55 // pred_region
          %s468 = sand.u32 %s149, 1
          %s469 = scalar_lea.sflag [#allocation4], %s468
          %s470 = sand.u32 %s149, 1
          %s471 = smul.addr %s470, 32
          %s472 = scalar_lea.vmem [#allocation8], %s471
          %474 = dma.done %s469, 512
        $region60: #{tpu_custom_call.1} parent=55 // pred_fallthru
          _
      $region56: #{tpu_custom_call.1} parent=5 // pred_fallthru
        _
    $region6: #{tpu_custom_call.1} parent=1 // loop_footer
      %s21 = sadd.s32 1, %s17
    $region7: #{tpu_custom_call.1} parent=1 // loop_footer_branch
      %16 = sbr.rel target = $region3
    $region8: #{tpu_custom_call.1} parent=1 // loop_exit
      _
    %475 = vsyncpa [#allocation3], 1
    %s476 = scalar_lea.sflag [#allocation3], 1
    %477 = vsyncpa %s476, 1
    %478 = vsyncpa [#allocation6], 1
    %479 = vsyncpa [#allocation4], 1
    %s480 = scalar_lea.sflag [#allocation4], 1
    %481 = vsyncpa %s480, 1

</llo_original>
